<compile_context>
chip_gen: v5e
topology: v5e:2x2
jax: 0.10.0
libtpu: 0.0.40
codegen_flags: <defaults>
</compile_context>

<pallas_src>
import functools

import jax
import jax.numpy as jnp
from jax.experimental import pallas as pl
from jax.experimental.pallas import tpu as pltpu


def _rt_init_kernel(x_ref, rt_ref, *, valid_n, window):
    """Masked mean over `window` consecutive input rows per output row."""
    tile_g, c = rt_ref.shape
    rows = tile_g * window
    row0 = pl.program_id(0) * rows

    def window_sum(masked):
        # (tile_g, C) f32 sum of each window of `window` rows of this block.
        if window % 8 == 0:
            # Free reshape: the window axis splits the sublane dim exactly on
            # (8, 128) tile boundaries for f32.
            x = x_ref[...]
            if masked:
                ridx = jax.lax.broadcasted_iota(jnp.int32, (rows, 1), 0) + row0
                # Select in the native dtype (bf16-friendly on v6e/v7x), then
                # accumulate in f32.  Select (not arithmetic) so garbage in
                # Pallas edge-padded rows can never propagate NaNs.
                x = jnp.where(ridx < valid_n, x, 0)
            return jnp.sum(x.astype(jnp.float32).reshape(tile_g, window, c),
                           axis=1)
        # W not a multiple of the f32 sublane tile: the reshape above would
        # trigger a hidden VMEM relayout, so use strided loads instead.
        widx = row0 + jax.lax.broadcasted_iota(jnp.int32, (tile_g, 1), 0) * window
        s = jnp.zeros((tile_g, c), jnp.float32)
        for w in range(window):                      # static unroll, W is small
            xv = x_ref[pl.ds(w, tile_g, stride=window), :]
            if masked:
                xv = jnp.where(widx + w < valid_n, xv, 0)
            s = s + xv.astype(jnp.float32)
        return s

    no_padding = row0 + rows <= valid_n

    @pl.when(no_padding)
    def _fast():
        # Interior block: every row is a valid token, count == window.
        rt_ref[...] = (window_sum(False) * (1.0 / window)).astype(rt_ref.dtype)

    @pl.when(jnp.logical_not(no_padding))
    def _masked():
        s = window_sum(True)
        # Valid-token count per window: clip(N - window_start, 1, W).  The
        # lower clip of 1 guards fully-padded windows -> rt row of zeros
        # (torch nanmean would give NaN; the torch code asserts that never
        # happens, so 0.0 is a documented, benign deviation).
        win_start = row0 + jax.lax.broadcasted_iota(
            jnp.int32, (tile_g, 1), 0) * window
        cnt = jnp.clip(valid_n - win_start, 1, window).astype(jnp.float32)
        inv = 1.0 / cnt                                  # (tile_g, 1) only
        rt_ref[...] = (s * inv).astype(rt_ref.dtype)


def _vmem_budget_bytes():
    """Total live VMEM budget for the double-buffered in+out blocks.

    Sized to stay inside the scoped-VMEM compiler defaults (v5e: 16 MiB,
    v6e/v7x: 32 MiB) so vmem_limit_bytes never needs raising.
    """
    try:
        kind = jax.devices()[0].device_kind.lower()
    except Exception:
        kind = ""
    if "v6" in kind or "v7" in kind:
        return 24 << 20          # large blocks: amortize ~0.35 us/step on v7x
    return 10 << 20              # v5e and older: tightest scoped default


def _pick_tile_g(num_win, window, c, itemsize):
    """Windows per grid step, using lane-padded VMEM accounting."""
    lane_c = ((c + 127) // 128) * 128            # VMEM lane-pads C up to 128
    # Per-window live bytes: double-buffered input rows + output row.
    per_win = 2 * (window * lane_c + lane_c) * itemsize
    tile_g = max(8, (_vmem_budget_bytes() // per_win) // 8 * 8)
    # Guarantee >= 2 grid steps when the work can be split, so the "parallel"
    # grid axis can be sharded across v7x's two TensorCores.
    half = ((pl.cdiv(num_win, 2) + 7) // 8) * 8
    tile_g = min(tile_g, max(8, half))
    # Never exceed the (rounded-up) number of windows.
    tile_g = min(tile_g, ((num_win + 7) // 8) * 8)
    return tile_g


def token_initialiser_rt(data, *, num_win, window):
    """nanmean-over-window hot path as a Pallas kernel.

    Args:
      data: (N, C) features; N need NOT be a multiple of `window` / patch_size.
      num_win: number of output windows (over the conceptually padded tokens).
      window: tokens per window (W = patch_size // rt_size).
    Returns:
      (num_win, C) relay tokens, same dtype as `data`.
    """
    n, c = data.shape
    itemsize = jnp.dtype(data.dtype).itemsize
    tile_g = _pick_tile_g(num_win, window, c, itemsize)
    grid = (pl.cdiv(num_win, tile_g),)

    kernel = functools.partial(_rt_init_kernel, valid_n=n, window=window)
    return pl.pallas_call(
        kernel,
        out_shape=jax.ShapeDtypeStruct((num_win, c), data.dtype),
        grid_spec=pltpu.PrefetchScalarGridSpec(
            num_scalar_prefetch=0,
            grid=grid,
            # Blocks span complete rows, so both DMAs are fully contiguous in
            # HBM; the last grid block simply reads past N (Pallas edge
            # padding) and the kernel masks those rows from the static N.
            in_specs=[pl.BlockSpec((tile_g * window, c), lambda i: (i, 0))],
            out_specs=pl.BlockSpec((tile_g, c), lambda i: (i, 0)),
        ),
        compiler_params=pltpu.CompilerParams(
            dimension_semantics=("parallel",),
        ),
    )(data)


def token_initialiser_forward(data, *, dim, patch_size, rt_size=1):
    """Full TokenInitialiser.forward (use_cpe=False).

    Args:
      data: (N, C) octree node features at a given depth.
    Returns:
      rt: (num_windows, C) relay tokens.
    """
    k, g, c = patch_size, rt_size, dim
    assert k % g == 0, "patch_size must be divisible by rt_size"
    assert data.shape[1] == c
    w = k // g
    n = data.shape[0]

    # octree.patch_partition pads the token count up to a multiple of K; we do
    # NOT materialize that padding -- the kernel masks padded rows in-place.
    n_padded = n + ((-n) % k)
    num_win = n_padded // w
    return token_initialiser_rt(data, num_win=num_win, window=w)


def _reference(data, *, dim, patch_size, rt_size=1):
    """Pure-JAX reference: masked_fill + nanmean semantics, with a guard for
    windows that are entirely padding (torch only asserts against that case)."""
    w = patch_size // rt_size
    n = data.shape[0]
    pad = (-n) % patch_size
    data_p = jnp.pad(data, ((0, pad), (0, 0)))
    num_win = data_p.shape[0] // w
    data_w = data_p.reshape(num_win, w, dim)
    keep = (jnp.arange(data_p.shape[0]).reshape(num_win, w) < n)
    keep = keep.astype(jnp.float32)[:, :, None]
    return (data_w * keep).sum(axis=1) / jnp.maximum(keep.sum(axis=1), 1.0)


if __name__ == "__main__":
    key = jax.random.PRNGKey(0)

    # Case 1: defaults (rt_size=1), N not a multiple of patch_size -> padded tail.
    dim, patch_size, rt_size = 32, 8, 1
    n = 123
    data = jax.random.normal(key, (n, dim), dtype=jnp.float32)
    rt = token_initialiser_forward(data, dim=dim, patch_size=patch_size,
                                   rt_size=rt_size)
    rt = jax.block_until_ready(rt)
    ref = _reference(data, dim=dim, patch_size=patch_size, rt_size=rt_size)
    assert rt.shape == ref.shape == (16, dim)
    assert not bool(jnp.any(jnp.isnan(rt)))
    assert bool(jnp.allclose(rt, ref, atol=1e-5, rtol=1e-5))

    # Case 2: rt_size > 1 with enough padding that the final window is entirely
    # padded (exercises the fully-padded-window guard).
    dim2, patch_size2, rt_size2 = 32, 16, 2
    n2 = 113
    data2 = jax.random.normal(jax.random.PRNGKey(0), (n2, dim2), dtype=jnp.float32)
    rt2 = token_initialiser_forward(data2, dim=dim2, patch_size=patch_size2,
                                    rt_size=rt_size2)
    rt2 = jax.block_until_ready(rt2)
    ref2 = _reference(data2, dim=dim2, patch_size=patch_size2, rt_size=rt_size2)
    assert rt2.shape == ref2.shape == (16, dim2)
    assert not bool(jnp.any(jnp.isnan(rt2)))
    assert bool(jnp.allclose(rt2, ref2, atol=1e-5, rtol=1e-5))

    # Case 3: W = patch_size // rt_size = 4 (not a multiple of the sublane
    # tile) -> exercises the strided-load window-sum path.
    dim3, patch_size3, rt_size3 = 32, 8, 2
    n3 = 57
    data3 = jax.random.normal(jax.random.PRNGKey(0), (n3, dim3), dtype=jnp.float32)
    rt3 = token_initialiser_forward(data3, dim=dim3, patch_size=patch_size3,
                                    rt_size=rt_size3)
    rt3 = jax.block_until_ready(rt3)
    ref3 = _reference(data3, dim=dim3, patch_size=patch_size3, rt_size=rt_size3)
    assert rt3.shape == ref3.shape == (16, dim3)
    assert not bool(jnp.any(jnp.isnan(rt3)))
    assert bool(jnp.allclose(rt3, ref3, atol=1e-5, rtol=1e-5))

    print("KERNEL_OK")
</pallas_src>

<mosaic_0001>
module attributes {stable_mosaic.version = 11 : i64} {
  func.func @_rt_init_kernel(%arg0: i32, %arg1: memref<64x32xf32, #tpu.memory_space<vmem>>, %arg2: memref<8x32xf32, #tpu.memory_space<vmem>>) attributes {dimension_semantics = [#tpu.dimension_semantics<parallel>], iteration_bounds = array<i64: 2>, scalar_prefetch = 0 : i64, scratch_operands = 0 : i64, tpu.core_type = #tpu.core_type<tc>, window_params = [{transform_indices = @transform_0, window_bounds = array<i64: 64, 32>}, {transform_indices = @transform_1, window_bounds = array<i64: 8, 32>}]} {
    %c64_i32 = arith.constant 64 : i32
    %0 = arith.muli %arg0, %c64_i32 : i32
    %c64_i32_0 = arith.constant 64 : i32
    %1 = arith.addi %0, %c64_i32_0 : i32
    %c123_i32 = arith.constant 123 : i32
    %2 = arith.cmpi sle, %1, %c123_i32 : i32
    %3 = arith.extui %2 : i1 to i32
    %c0_i32 = arith.constant 0 : i32
    %4 = arith.cmpi ne, %3, %c0_i32 : i32
    scf.if %4 {
      %c0 = arith.constant 0 : index
      %c0_2 = arith.constant 0 : index
      %8 = vector.load %arg1[%c0, %c0_2] : memref<64x32xf32, #tpu.memory_space<vmem>>, vector<64x32xf32>
      %9 = vector.shape_cast %8 : vector<64x32xf32> to vector<8x8x32xf32>
      %cst = arith.constant dense<0.000000e+00> : vector<8x32xf32>
      %10 = vector.multi_reduction <add>, %9, %cst [1] : vector<8x8x32xf32> to vector<8x32xf32>
      %cst_3 = arith.constant 1.250000e-01 : f32
      %11 = vector.broadcast %cst_3 : f32 to vector<8x32xf32>
      %12 = arith.mulf %10, %11 : vector<8x32xf32>
      %c0_4 = arith.constant 0 : index
      %c0_5 = arith.constant 0 : index
      %13 = vector.load %arg2[%c0_4, %c0_5] : memref<8x32xf32, #tpu.memory_space<vmem>>, vector<8x32xf32>
      tpu.vector_store %arg2[%c0_4, %c0_5], %12 {strides = array<i32>} : memref<8x32xf32, #tpu.memory_space<vmem>>, vector<8x32xf32>,
    } else {
    }
    %true = arith.constant true
    %5 = arith.xori %2, %true : i1
    %6 = arith.extui %5 : i1 to i32
    %c0_i32_1 = arith.constant 0 : i32
    %7 = arith.cmpi ne, %6, %c0_i32_1 : i32
    scf.if %7 {
      %c0 = arith.constant 0 : index
      %c0_2 = arith.constant 0 : index
      %8 = vector.load %arg1[%c0, %c0_2] : memref<64x32xf32, #tpu.memory_space<vmem>>, vector<64x32xf32>
      %9 = tpu.iota {dimensions = array<i32: 0>} : vector<64x1xi32>
      %10 = vector.broadcast %0 : i32 to vector<64x1xi32>
      %11 = arith.addi %9, %10 : vector<64x1xi32>
      %c123_i32_3 = arith.constant 123 : i32
      %12 = vector.broadcast %c123_i32_3 : i32 to vector<64x1xi32>
      %13 = arith.cmpi slt, %11, %12 : vector<64x1xi32>
      %c0_i32_4 = arith.constant 0 : i32
      %14 = arith.sitofp %c0_i32_4 : i32 to f32
      %15 = vector.shape_cast %13 : vector<64x1xi1> to vector<64x1xi1>
      %16 = vector.broadcast %15 : vector<64x1xi1> to vector<64x32xi1>
      %17 = vector.broadcast %14 : f32 to vector<64x32xf32>
      %18 = arith.select %16, %8, %17 : vector<64x32xi1>, vector<64x32xf32>
      %19 = vector.shape_cast %18 : vector<64x32xf32> to vector<8x8x32xf32>
      %cst = arith.constant dense<0.000000e+00> : vector<8x32xf32>
      %20 = vector.multi_reduction <add>, %19, %cst [1] : vector<8x8x32xf32> to vector<8x32xf32>
      %21 = tpu.iota {dimensions = array<i32: 0>} : vector<8x1xi32>
      %c8_i32 = arith.constant 8 : i32
      %22 = vector.broadcast %c8_i32 : i32 to vector<8x1xi32>
      %23 = arith.muli %21, %22 : vector<8x1xi32>
      %24 = vector.broadcast %0 : i32 to vector<8x1xi32>
      %25 = arith.addi %24, %23 : vector<8x1xi32>
      %c123_i32_5 = arith.constant 123 : i32
      %26 = vector.broadcast %c123_i32_5 : i32 to vector<8x1xi32>
      %27 = arith.subi %26, %25 : vector<8x1xi32>
      %c1_i32 = arith.constant 1 : i32
      %c8_i32_6 = arith.constant 8 : i32
      %28 = vector.broadcast %c1_i32 : i32 to vector<8x1xi32>
      %29 = arith.maxsi %28, %27 : vector<8x1xi32>
      %30 = vector.broadcast %c8_i32_6 : i32 to vector<8x1xi32>
      %31 = arith.minsi %30, %29 : vector<8x1xi32>
      %32 = arith.sitofp %31 : vector<8x1xi32> to vector<8x1xf32>
      %cst_7 = arith.constant 1.000000e+00 : f32
      %33 = vector.broadcast %cst_7 : f32 to vector<8x1xf32>
      %34 = arith.divf %33, %32 : vector<8x1xf32>
      %35 = vector.broadcast %34 : vector<8x1xf32> to vector<8x32xf32>
      %36 = arith.mulf %20, %35 : vector<8x32xf32>
      %c0_8 = arith.constant 0 : index
      %c0_9 = arith.constant 0 : index
      %37 = vector.load %arg2[%c0_8, %c0_9] : memref<8x32xf32, #tpu.memory_space<vmem>>, vector<8x32xf32>
      tpu.vector_store %arg2[%c0_8, %c0_9], %36 {strides = array<i32>} : memref<8x32xf32, #tpu.memory_space<vmem>>, vector<8x32xf32>,
    } else {
    }
    return
  }
  func.func @transform_0(%arg0: i32) -> (i32, i32) {
    %c0_i32 = arith.constant 0 : i32
    %c0_i32_0 = arith.constant 0 : i32
    return %arg0, %c0_i32 : i32, i32
  }
  func.func @transform_1(%arg0: i32) -> (i32, i32) {
    %c0_i32 = arith.constant 0 : i32
    %c0_i32_0 = arith.constant 0 : i32
    return %arg0, %c0_i32 : i32, i32
  }
}

</mosaic_0001>

<llo_original>
// kernel: tpu_custom_call.1
$region0: #{tpu_custom_call.1}
  #allocation0 [shape = 'u32[]', space=smem, size = 0x4, offset = 0x4, fixed_abs, tag = 'smem constant byte address 0x4 - core index']
  #allocation1 [shape = 'u32[72,128]{1,0:T(1,128)}', space=vmem, size = 0x9000, scoped, tag = 'internal scratch']
  %s0 = inlined_call_operand.vmem [shape: f32[123,32], index: 0, kind: input, shape index: {}]
  %s1 = inlined_call_operand.hbm [shape: f32[16,32], index: 1, kind: output, shape index: {}]
  %s2 = sld [smem:[#allocation0]]
  $region45: #{tpu_custom_call.1} parent=0
    _
  %s4 = ssub.s32 1, %s2
  %s5 = scalar_select 0, %s4, %s2
  $region1: #{tpu_custom_call.1} parent=0
    #allocation2 [shape = 'u8[8192]{0}', space=vmem, size = 0x2000, scoped, tag = 'output window, operand 0']
    #allocation3 [shape = 's32[2]{0}', space=sflag, size = 0x8, scoped, tag = 'scoped memory for tpu_custom_call.1']
    %6 = vsyncpa [#allocation3], 0
    %s7 = scalar_lea.sflag [#allocation3], 1
    %8 = vsyncpa %s7, 0
    loop: start=0, step=1, limit=4
    $region2: #{tpu_custom_call.1} parent=1 // loop_pre_header
      _
    $region3: #{tpu_custom_call.1} parent=1 // loop_header
      %s10 = sphi 0, %s14
      %p11 = scmp.ge.s32.totalorder %s10, 4
      %s20 = sphi 0, %s22
      %s23 = sphi 0, %s20
      %s24 = sphi 0, %s23
      %s40 = sphi 0, %s24
      %s46 = sphi 0, %s48
      %s49 = sphi 0, %s46
      %s50 = sphi 0, %s49
      %s66 = sphi 0, %s50
    $region4: #{tpu_custom_call.1} parent=1 // loop_header_branch
      %13 = sbr.rel (%p11) target = $region8
    $region5: #{tpu_custom_call.1} parent=1 // loop_body
      %s15 = ssub.s32 %s10, 1
      %s16 = ssub.s32 %s10, 2
      %s17 = sadd.s32 %s10, 1
      %s18 = ssub.s32 %s10, %s17
      %p19 = scmp.eq.s32.totalorder %s18, 0
      %s21 = sadd.s32 %s20, 1
      %s22 = scalar_select %p19, %s20, %s21
      %p25 = pneg %p19
      %p26 = scmp.eq.s32.totalorder %s10, 1
      %p27 = por %p25, %p26
      %p28 = scmp.ne.s32.totalorder %s20, %s23
      %p29 = scmp.eq.s32.totalorder %s10, 0
      %p30 = por %p28, %p29
      %p31 = scmp.ne.s32.totalorder %s20, %s23
      %p32 = scmp.eq.s32.totalorder %s15, 1
      %p33 = por %p31, %p32
      %p34 = scmp.ne.s32.totalorder %s23, %s24
      %p35 = scmp.eq.s32.totalorder %s15, 0
      %p36 = por %p34, %p35
      %p37 = scmp.ne.s32.totalorder %s23, %s24
      %p38 = scmp.eq.s32.totalorder %s16, 1
      %p39 = por %p37, %p38
      %p41 = scmp.ne.s32.totalorder %s24, %s40
      %p42 = scmp.eq.s32.totalorder %s16, 0
      %p43 = por %p41, %p42
      %s44 = ssub.s32 %s10, %s17
      %p45 = scmp.eq.s32.totalorder %s44, 0
      %s47 = sadd.s32 %s46, 1
      %s48 = scalar_select %p45, %s46, %s47
      %p51 = pneg %p45
      %p52 = scmp.eq.s32.totalorder %s10, 1
      %p53 = por %p51, %p52
      %p54 = scmp.ne.s32.totalorder %s46, %s49
      %p55 = scmp.eq.s32.totalorder %s10, 0
      %p56 = por %p54, %p55
      %p57 = scmp.ne.s32.totalorder %s46, %s49
      %p58 = scmp.eq.s32.totalorder %s15, 1
      %p59 = por %p57, %p58
      %p60 = scmp.ne.s32.totalorder %s49, %s50
      %p61 = scmp.eq.s32.totalorder %s15, 0
      %p62 = por %p60, %p61
      %p63 = scmp.ne.s32.totalorder %s49, %s50
      %p64 = scmp.eq.s32.totalorder %s16, 1
      %p65 = por %p63, %p64
      %p67 = scmp.ne.s32.totalorder %s50, %s66
      %p68 = scmp.eq.s32.totalorder %s16, 0
      %p69 = por %p67, %p68
      %p70 = scmp.le.s32.totalorder 1, %s10
      %p71 = scmp.lt.s32.totalorder %s10, 3
      %p72 = pnand %p70, %p71
      %p73 = pneg %p72
      // Predicated region
      $region9: #{tpu_custom_call.1} parent=5 // pred_check
        _
      $region10: #{tpu_custom_call.1} parent=5 // pred_check_branch
        %75 = sbr.rel (%p72) target = $region12
      $region11: #{tpu_custom_call.1} parent=5 // pred_region
        %s76 = ssub.s32 %s10, 1
      $region12: #{tpu_custom_call.1} parent=5 // pred_fallthru
        _
      %p77 = scmp.lt.s32.totalorder %s10, 2
      // Predicated region
      $region13: #{tpu_custom_call.1} parent=5 // pred_check
        %p78 = pneg %p77
      $region14: #{tpu_custom_call.1} parent=5 // pred_check_branch
        %80 = sbr.rel (%p78) target = $region16
      $region15: #{tpu_custom_call.1} parent=5 // pred_region
        // Predicated region
        $region17: #{tpu_custom_call.1} parent=15 // pred_check
          %p81 = pneg %p30
        $region18: #{tpu_custom_call.1} parent=15 // pred_check_branch
          %83 = sbr.rel (%p81) target = $region20
        $region19: #{tpu_custom_call.1} parent=15 // pred_region
          %s84 = smul.u32 8, %s10
          %p85 = scmp.lt.s32.totalorder %s84, 15
          %s86 = scalar_select %p85, %s84, 15
          %s87 = smul.addr %s86, 8
          %s88 = scalar_lea.vmem %s0, %s87
          %s89 = smul.u32 8, %s10
        $region20: #{tpu_custom_call.1} parent=15 // pred_fallthru
          _
      $region16: #{tpu_custom_call.1} parent=5 // pred_fallthru
        _
      %p90 = scmp.le.s32.totalorder 1, %s10
      %p91 = scmp.lt.s32.totalorder %s10, 3
      %p92 = pnand %p90, %p91
      %p93 = pneg %p92
      // Predicated region
      $region21: #{tpu_custom_call.1} parent=5 // pred_check
        _
      $region22: #{tpu_custom_call.1} parent=5 // pred_check_branch
        %95 = sbr.rel (%p92) target = $region24
      $region23: #{tpu_custom_call.1} parent=5 // pred_region
        %s96 = ssub.s32 %s10, 1
        %s97 = smul.u32 8, %s15
        %p98 = scmp.lt.s32.totalorder %s97, 15
        %s99 = scalar_select %p98, %s97, 15
        %s100 = smul.addr %s99, 8
        %s101 = scalar_lea.vmem %s0, %s100
        %p102 = pneg %p36
        %p103 = pneg %p33
        %p104 = pneg %p62
        %p105 = pneg %p59
        %s106 = sand.u32 %s49, 1
        %s107 = scalar_lea.sflag [#allocation3], %s106
        %s108 = sand.u32 %s49, 1
        %s109 = smul.addr %s108, 8
        %s110 = scalar_lea.vmem [#allocation2], %s109
        %s111 = smul.u32 8, %s15
        %p112 = scmp.lt.s32.totalorder %s111, 15
        %s113 = scalar_select %p112, %s111, 15
        %s114 = smul.addr %s113, 8
        %s115 = scalar_lea.vmem %s0, %s114
        %s116 = smul.u32 8, %s15
        %s117 = smul.u32 %s15, 64
        %s118 = sadd.s32 %s117, 64
        %p119 = scmp.le.s32.totalorder %s118, 123
        // Predicated region
        $region25: #{tpu_custom_call.1} parent=23 // pred_check
          %p120 = pneg %p119
        $region26: #{tpu_custom_call.1} parent=23 // pred_check_branch
          %122 = sbr.rel (%p120) target = $region28
        $region27: #{tpu_custom_call.1} parent=23 // pred_region
          %v123 = vld [vmem:[%s115] sm:$0xff]
          %v124 = vld [vmem:[%s115 + $0x8] sm:$0xff]
          %v125 = vld [vmem:[%s115 + $0x10] sm:$0xff]
          %v126 = vld [vmem:[%s115 + $0x18] sm:$0xff]
          %v127 = vld [vmem:[%s115 + $0x20] sm:$0xff]
          %v128 = vld [vmem:[%s115 + $0x28] sm:$0xff]
          %v129 = vld [vmem:[%s115 + $0x30] sm:$0xff]
          %v130 = vld [vmem:[%s115 + $0x38] sm:$0xff]
          %vm131 = vcmask 261120
          %v132 = vsel %vm131, %v123, 0.0
          %v133 = vrot.slane %v132, 4
          %v134 = vadd.f32 %v132, %v133
          %v135 = vrot.slane %v134, 2
          %v136 = vadd.f32 %v134, %v135
          %v137 = vrot.slane %v136, 1
          %v138 = vadd.f32 %v136, %v137
          %v139 = vsel %vm131, %v124, 0.0
          %v140 = vrot.slane %v139, 4
          %v141 = vadd.f32 %v139, %v140
          %v142 = vrot.slane %v141, 2
          %v143 = vadd.f32 %v141, %v142
          %v144 = vrot.slane %v143, 1
          %v145 = vadd.f32 %v143, %v144
          %v146 = vsel %vm131, %v125, 0.0
          %v147 = vrot.slane %v146, 4
          %v148 = vadd.f32 %v146, %v147
          %v149 = vrot.slane %v148, 2
          %v150 = vadd.f32 %v148, %v149
          %v151 = vrot.slane %v150, 1
          %v152 = vadd.f32 %v150, %v151
          %v153 = vsel %vm131, %v126, 0.0
          %v154 = vrot.slane %v153, 4
          %v155 = vadd.f32 %v153, %v154
          %v156 = vrot.slane %v155, 2
          %v157 = vadd.f32 %v155, %v156
          %v158 = vrot.slane %v157, 1
          %v159 = vadd.f32 %v157, %v158
          %v160 = vsel %vm131, %v127, 0.0
          %v161 = vrot.slane %v160, 4
          %v162 = vadd.f32 %v160, %v161
          %v163 = vrot.slane %v162, 2
          %v164 = vadd.f32 %v162, %v163
          %v165 = vrot.slane %v164, 1
          %v166 = vadd.f32 %v164, %v165
          %v167 = vsel %vm131, %v128, 0.0
          %v168 = vrot.slane %v167, 4
          %v169 = vadd.f32 %v167, %v168
          %v170 = vrot.slane %v169, 2
          %v171 = vadd.f32 %v169, %v170
          %v172 = vrot.slane %v171, 1
          %v173 = vadd.f32 %v171, %v172
          %v174 = vsel %vm131, %v129, 0.0
          %v175 = vrot.slane %v174, 4
          %v176 = vadd.f32 %v174, %v175
          %v177 = vrot.slane %v176, 2
          %v178 = vadd.f32 %v176, %v177
          %v179 = vrot.slane %v178, 1
          %v180 = vadd.f32 %v178, %v179
          %v181 = vsel %vm131, %v130, 0.0
          %v182 = vrot.slane %v181, 4
          %v183 = vadd.f32 %v181, %v182
          %v184 = vrot.slane %v183, 2
          %v185 = vadd.f32 %v183, %v184
          %v186 = vrot.slane %v185, 1
          %v187 = vadd.f32 %v185, %v186
          %v188 = vmul.f32 %v138, 0.125
          %v189 = vmul.f32 %v145, 0.125
          %v190 = vmul.f32 %v152, 0.125
          %v191 = vmul.f32 %v159, 0.125
          %v192 = vmul.f32 %v166, 0.125
          %v193 = vmul.f32 %v173, 0.125
          %v194 = vmul.f32 %v180, 0.125
          %v195 = vmul.f32 %v187, 0.125
          %vm204 = vcmask 1041409
          %v205 = vsel %vm204, %v189, %v188
          %vm206 = vcmask 1042434
          %v207 = vsel %vm206, %v190, %v205
          %vm208 = vcmask 1043459
          %v209 = vsel %vm208, %v191, %v207
          %vm210 = vcmask 1044484
          %v211 = vsel %vm210, %v192, %v209
          %vm212 = vcmask 1045509
          %v213 = vsel %vm212, %v193, %v211
          %vm214 = vcmask 1046534
          %v215 = vsel %vm214, %v194, %v213
          %vm216 = vcmask 1047559
          %v217 = vsel %vm216, %v195, %v215
          %219 = vst.msk [vmem:[%s110] sm:$0xff] %vm131, %v217
        $region28: #{tpu_custom_call.1} parent=23 // pred_fallthru
          _
        %p220 = scmp.gt.s32.totalorder %s118, 123
        // Predicated region
        $region29: #{tpu_custom_call.1} parent=23 // pred_check
          %p221 = pneg %p220
        $region30: #{tpu_custom_call.1} parent=23 // pred_check_branch
          %223 = sbr.rel (%p221) target = $region32
        $region31: #{tpu_custom_call.1} parent=23 // pred_region
          %v224 = vld [vmem:[%s115] sm:$0xff]
          %v225 = vld [vmem:[%s115 + $0x8] sm:$0xff]
          %v226 = vld [vmem:[%s115 + $0x10] sm:$0xff]
          %v227 = vld [vmem:[%s115 + $0x18] sm:$0xff]
          %v228 = vld [vmem:[%s115 + $0x20] sm:$0xff]
          %v229 = vld [vmem:[%s115 + $0x28] sm:$0xff]
          %v230 = vld [vmem:[%s115 + $0x30] sm:$0xff]
          %v231 = vld [vmem:[%s115 + $0x38] sm:$0xff]
          %v232 = vlaneseq
          %v233 = vshrl.u32 %v232, 7
          %v234 = vadd.s32 %v233, 8
          %v235 = vadd.s32 %v233, 16
          %v236 = vadd.s32 %v233, 24
          %v237 = vadd.s32 %v233, 32
          %v238 = vadd.s32 %v233, 40
          %v239 = vadd.s32 %v233, 48
          %v240 = vadd.s32 %v233, 56
          %v241 = vstv %s117
          %v242 = vadd.s32 %v233, %v241
          %v243 = vadd.s32 %v234, %v241
          %v244 = vadd.s32 %v235, %v241
          %v245 = vadd.s32 %v236, %v241
          %v246 = vadd.s32 %v237, %v241
          %v247 = vadd.s32 %v238, %v241
          %v248 = vadd.s32 %v239, %v241
          %v249 = vadd.s32 %v240, %v241
          %vm250 = vcmp.lt.s32.totalorder %v242, 123
          %vm251 = vcmp.lt.s32.totalorder %v243, 123
          %vm252 = vcmp.lt.s32.totalorder %v244, 123
          %vm253 = vcmp.lt.s32.totalorder %v245, 123
          %vm254 = vcmp.lt.s32.totalorder %v246, 123
          %vm255 = vcmp.lt.s32.totalorder %v247, 123
          %vm256 = vcmp.lt.s32.totalorder %v248, 123
          %vm257 = vcmp.lt.s32.totalorder %v249, 123
          %v258 = vsel %vm250, 1, 0
          %v259 = vsel %vm251, 1, 0
          %v260 = vsel %vm252, 1, 0
          %v261 = vsel %vm253, 1, 0
          %v262 = vsel %vm254, 1, 0
          %v263 = vsel %vm255, 1, 0
          %v264 = vsel %vm256, 1, 0
          %v265 = vsel %vm257, 1, 0
          %vm266 = vcmp.eq.s32.totalorder %v258, 1
          %vm267 = vcmp.eq.s32.totalorder %v259, 1
          %vm268 = vcmp.eq.s32.totalorder %v260, 1
          %vm269 = vcmp.eq.s32.totalorder %v261, 1
          %vm270 = vcmp.eq.s32.totalorder %v262, 1
          %vm271 = vcmp.eq.s32.totalorder %v263, 1
          %vm272 = vcmp.eq.s32.totalorder %v264, 1
          %vm273 = vcmp.eq.s32.totalorder %v265, 1
          %v274 = vsel %vm266, %v224, 0.0
          %v275 = vsel %vm267, %v225, 0.0
          %v276 = vsel %vm268, %v226, 0.0
          %v277 = vsel %vm269, %v227, 0.0
          %v278 = vsel %vm270, %v228, 0.0
          %v279 = vsel %vm271, %v229, 0.0
          %v280 = vsel %vm272, %v230, 0.0
          %v281 = vsel %vm273, %v231, 0.0
          %vm282 = vcmask 261120
          %v283 = vsel %vm282, %v274, 0.0
          %v284 = vrot.slane %v283, 4
          %v285 = vadd.f32 %v283, %v284
          %v286 = vrot.slane %v285, 2
          %v287 = vadd.f32 %v285, %v286
          %v288 = vrot.slane %v287, 1
          %v289 = vadd.f32 %v287, %v288
          %v290 = vsel %vm282, %v275, 0.0
          %v291 = vrot.slane %v290, 4
          %v292 = vadd.f32 %v290, %v291
          %v293 = vrot.slane %v292, 2
          %v294 = vadd.f32 %v292, %v293
          %v295 = vrot.slane %v294, 1
          %v296 = vadd.f32 %v294, %v295
          %v297 = vsel %vm282, %v276, 0.0
          %v298 = vrot.slane %v297, 4
          %v299 = vadd.f32 %v297, %v298
          %v300 = vrot.slane %v299, 2
          %v301 = vadd.f32 %v299, %v300
          %v302 = vrot.slane %v301, 1
          %v303 = vadd.f32 %v301, %v302
          %v304 = vsel %vm282, %v277, 0.0
          %v305 = vrot.slane %v304, 4
          %v306 = vadd.f32 %v304, %v305
          %v307 = vrot.slane %v306, 2
          %v308 = vadd.f32 %v306, %v307
          %v309 = vrot.slane %v308, 1
          %v310 = vadd.f32 %v308, %v309
          %v311 = vsel %vm282, %v278, 0.0
          %v312 = vrot.slane %v311, 4
          %v313 = vadd.f32 %v311, %v312
          %v314 = vrot.slane %v313, 2
          %v315 = vadd.f32 %v313, %v314
          %v316 = vrot.slane %v315, 1
          %v317 = vadd.f32 %v315, %v316
          %v318 = vsel %vm282, %v279, 0.0
          %v319 = vrot.slane %v318, 4
          %v320 = vadd.f32 %v318, %v319
          %v321 = vrot.slane %v320, 2
          %v322 = vadd.f32 %v320, %v321
          %v323 = vrot.slane %v322, 1
          %v324 = vadd.f32 %v322, %v323
          %v325 = vsel %vm282, %v280, 0.0
          %v326 = vrot.slane %v325, 4
          %v327 = vadd.f32 %v325, %v326
          %v328 = vrot.slane %v327, 2
          %v329 = vadd.f32 %v327, %v328
          %v330 = vrot.slane %v329, 1
          %v331 = vadd.f32 %v329, %v330
          %v332 = vsel %vm282, %v281, 0.0
          %v333 = vrot.slane %v332, 4
          %v334 = vadd.f32 %v332, %v333
          %v335 = vrot.slane %v334, 2
          %v336 = vadd.f32 %v334, %v335
          %v337 = vrot.slane %v336, 1
          %v338 = vadd.f32 %v336, %v337
          %v339 = vmul.u32 %v233, 8
          %v340 = vadd.s32 %v241, %v339
          %v341 = vsub.s32 123, %v340
          %vm342 = vcmp.gt.s32.totalorder %v341, 1
          %v343 = vsel %vm342, %v341, 1
          %vm344 = vcmp.lt.s32.totalorder %v343, 8
          %v345 = vsel %vm344, %v343, 8
          %v346 = vcvt.s32.f32 %v345
          %v347 = vrcp.pop %v346
          %v348 = vmul.f32 %v346, %v347
          %v349 = vsub.f32 1.0, %v348
          %v350 = vmul.f32 %v347, %v349
          %v351 = vadd.f32 %v347, %v350
          %vm352 = vweird.f32 %v346
          %vm353 = vweird.f32 %v347
          %vm354 = vmor %vm352, %vm353
          %v355 = vsel %vm354, %v347, %v351
          %v356 = vand.u32 2147483647, %v346
          %vm357 = vcmp.eq.f32.partialorder %v356, 8.507059e+37
          %v358 = vand.u32 %v346, 2147483648
          %v359 = vor.u32 1.1754944e-38, %v358
          %v360 = vsel %vm357, %v359, %v355
          %v361 = vmul.f32 1.0, %v360
          %v363 = vrot.slane %v361, 1
          %v364 = vrot.slane %v361, 2
          %v365 = vrot.slane %v361, 3
          %v366 = vrot.slane %v361, 4
          %v367 = vrot.slane %v361, 5
          %v368 = vrot.slane %v361, 6
          %v369 = vrot.slane %v361, 7
          %v378 = vmul.f32 %v289, %v361
          %v379 = vmul.f32 %v296, %v363
          %v380 = vmul.f32 %v303, %v364
          %v381 = vmul.f32 %v310, %v365
          %v382 = vmul.f32 %v317, %v366
          %v383 = vmul.f32 %v324, %v367
          %v384 = vmul.f32 %v331, %v368
          %v385 = vmul.f32 %v338, %v369
          %v394 = vrot.slane %v379, 7
          %vm395 = vcmask 1041409
          %v396 = vsel %vm395, %v394, %v378
          %v397 = vrot.slane %v380, 6
          %vm398 = vcmask 1042434
          %v399 = vsel %vm398, %v397, %v396
          %v400 = vrot.slane %v381, 5
          %vm401 = vcmask 1043459
          %v402 = vsel %vm401, %v400, %v399
          %v403 = vrot.slane %v382, 4
          %vm404 = vcmask 1044484
          %v405 = vsel %vm404, %v403, %v402
          %v406 = vrot.slane %v383, 3
          %vm407 = vcmask 1045509
          %v408 = vsel %vm407, %v406, %v405
          %v409 = vrot.slane %v384, 2
          %vm410 = vcmask 1046534
          %v411 = vsel %vm410, %v409, %v408
          %v412 = vrot.slane %v385, 1
          %vm413 = vcmask 1047559
          %v414 = vsel %vm413, %v412, %v411
          %416 = vst.msk [vmem:[%s110] sm:$0xff] %vm282, %v414
        $region32: #{tpu_custom_call.1} parent=23 // pred_fallthru
          _
        %s417 = sand.u32 %s49, 1
        %s418 = scalar_lea.sflag [#allocation3], %s417
        %s419 = sand.u32 %s49, 1
        %s420 = smul.addr %s419, 8
        %s421 = scalar_lea.vmem [#allocation2], %s420
        // Predicated region
        $region33: #{tpu_custom_call.1} parent=23 // pred_check
          %p422 = pneg %p59
        $region34: #{tpu_custom_call.1} parent=23 // pred_check_branch
          %424 = sbr.rel (%p422) target = $region36
        $region35: #{tpu_custom_call.1} parent=23 // pred_region
          %426 = vsyncadd %s418, 0
          %s427 = smul.addr %s15, 8
          %s428 = scalar_lea.hbm %s1, %s427
          %s430 = sshll.u32 %s421, 4
          %s431 = int_to_ptr.vmem [resolvable:$true] %s430
          %s432 = sshll.u32 %s428, 4
          %s433 = int_to_ptr.hbm [resolvable:$true] %s432
          %435 = dma.vmem_to_hbm [thread:$0]  %s431, 128, %s433, %s418
        $region36: #{tpu_custom_call.1} parent=23 // pred_fallthru
          _
      $region24: #{tpu_custom_call.1} parent=5 // pred_fallthru
        _
      %p436 = scmp.le.s32.totalorder 2, %s10
      // Predicated region
      $region37: #{tpu_custom_call.1} parent=5 // pred_check
        %p437 = pneg %p436
      $region38: #{tpu_custom_call.1} parent=5 // pred_check_branch
        %439 = sbr.rel (%p437) target = $region40
      $region39: #{tpu_custom_call.1} parent=5 // pred_region
        %s440 = ssub.s32 %s10, 2
        // Predicated region
        $region41: #{tpu_custom_call.1} parent=39 // pred_check
          %p441 = pneg %p65
        $region42: #{tpu_custom_call.1} parent=39 // pred_check_branch
          %443 = sbr.rel (%p441) target = $region44
        $region43: #{tpu_custom_call.1} parent=39 // pred_region
          %s444 = sand.u32 %s50, 1
          %s445 = scalar_lea.sflag [#allocation3], %s444
          %s446 = sand.u32 %s50, 1
          %s447 = smul.addr %s446, 8
          %s448 = scalar_lea.vmem [#allocation2], %s447
          %450 = dma.done %s445, 128
        $region44: #{tpu_custom_call.1} parent=39 // pred_fallthru
          _
      $region40: #{tpu_custom_call.1} parent=5 // pred_fallthru
        _
    $region6: #{tpu_custom_call.1} parent=1 // loop_footer
      %s14 = sadd.s32 1, %s10
    $region7: #{tpu_custom_call.1} parent=1 // loop_footer_branch
      %9 = sbr.rel target = $region3
    $region8: #{tpu_custom_call.1} parent=1 // loop_exit
      _
    %451 = vsyncpa [#allocation3], 1
    %s452 = scalar_lea.sflag [#allocation3], 1
    %453 = vsyncpa %s452, 1

</llo_original>
